<compile_context>
chip_gen: v7x
topology: tpu7x:2x2x1
jax: 0.10.0
libtpu: 0.0.40
codegen_flags: <defaults>
</compile_context>

<pallas_src>
import functools
import math

import jax
import jax.numpy as jnp
from jax import lax
from jax.experimental import pallas as pl
from jax.experimental.pallas import tpu as pltpu

MU = 0.0
SIGMA = 0.05
_TWO_PI = 2.0 * math.pi


def _bits_to_one_two(bits_u32):
    """uint32 random bits -> float32 uniform in [1, 2) via the mantissa trick."""
    mant = (bits_u32 >> jnp.uint32(9)) | jnp.uint32(0x3F800000)
    return lax.bitcast_convert_type(mant, jnp.float32)


def _vcae_noise_kernel(bits_a_ref, bits_b_ref, o_ref, *, mu, sigma):
    """Fill o_ref (rows, C) with N(mu, sigma^2) using both Box-Muller outputs.

    bits_a_ref / bits_b_ref have ceil(rows/2) rows each; each uniform pair
    produces two output rows (cos branch -> top half, sin branch -> bottom).
    """
    f_a = _bits_to_one_two(bits_a_ref[...])            # [1, 2)
    f_b = _bits_to_one_two(bits_b_ref[...])            # [1, 2)

    u1 = jnp.float32(2.0) - f_a                        # (0, 1] -> log is safe
    theta = jnp.float32(_TWO_PI) * (f_b - jnp.float32(1.0))  # [0, 2*pi)

    r = jnp.sqrt(jnp.float32(-2.0) * jnp.log(u1))      # EUP (log) + sqrt
    z1 = r * jnp.cos(theta)                            # standard normal
    z2 = r * jnp.sin(theta)                            # second (free) normal

    z = jnp.concatenate([z1, z2], axis=0)              # (2 * half_rows, C)
    rows = o_ref.shape[0]
    if z.shape[0] != rows:                             # static trace-time check
        z = z[:rows]                                   # odd-row tail (small path)
    o_ref[...] = (z * jnp.float32(sigma) + jnp.float32(mu)).astype(o_ref.dtype)


def variance_constrained_ae_bottleneck(x, *, seed=0, key=None, mu=MU, sigma=SIGMA):
    """JAX/Pallas equivalent of VarianceConstrainedAEBottleneck.forward.

    Args:
      x: array of rank >= 2 (e.g. NCHW activations). Only x.shape[:2] is used.
      seed / key: explicit PRNG seed or jax.random key (torch.randn uses the
        global RNG state; here randomness is made explicit for determinism).
    Returns:
      float32 array of shape x.shape[:2] ~ N(mu, sigma^2).
    """
    B, C = int(x.shape[0]), int(x.shape[1])
    if key is None:
        key = jax.random.PRNGKey(seed)
    ka, kb = jax.random.split(key)

    kernel = functools.partial(_vcae_noise_kernel, mu=mu, sigma=sigma)
    out_shape = jax.ShapeDtypeStruct((B, C), jnp.float32)
    cost = pl.CostEstimate(
        flops=12 * B * C,            # uniform conv + Box-Muller arith + scale/shift
        transcendentals=2 * B * C,   # log/sqrt/cos/sin per output pair
        bytes_accessed=2 * B * C * 4,
    )

    out_bytes = B * C * 4
    if out_bytes <= (2 << 20):
        # Small output (typical bottleneck shapes): single whole-array block,
        # no grid, exact (B, C) output -> no pad/slice, minimal launch overhead.
        hm = (B + 1) // 2
        bits_a = jax.random.bits(ka, (hm, C), dtype=jnp.uint32)
        bits_b = jax.random.bits(kb, (hm, C), dtype=jnp.uint32)
        return pl.pallas_call(
            kernel,
            out_shape=out_shape,
            cost_estimate=cost,
        )(bits_a, bits_b)

    # Large output: 1-D row grid, lane-dense (TM, C) output tiles.
    # Keep the double-buffered output tile (+ two bits tiles) well under the
    # v7x scoped-VMEM limit: TM * C * 4 <= ~4 MiB, TM a multiple of 16.
    bytes_per_row = C * 4
    tm = min(1024, max(16, (4 << 20) // max(1, bytes_per_row)))
    tm = max(16, (tm // 16) * 16)
    hm = tm // 2
    n_tiles = pl.cdiv(B, tm)
    bits_rows = n_tiles * hm                     # full blocks for both inputs
    bits_a = jax.random.bits(ka, (bits_rows, C), dtype=jnp.uint32)
    bits_b = jax.random.bits(kb, (bits_rows, C), dtype=jnp.uint32)

    grid_spec = pltpu.PrefetchScalarGridSpec(
        num_scalar_prefetch=0,
        grid=(n_tiles,),
        in_specs=[
            pl.BlockSpec((hm, C), lambda i: (i, 0)),
            pl.BlockSpec((hm, C), lambda i: (i, 0)),
        ],
        out_specs=pl.BlockSpec((tm, C), lambda i: (i, 0)),
    )
    return pl.pallas_call(
        kernel,
        out_shape=out_shape,
        grid_spec=grid_spec,
        compiler_params=pltpu.CompilerParams(
            dimension_semantics=("parallel",)),   # shard rows across TCs (v7x)
        cost_estimate=cost,
    )(bits_a, bits_b)


if __name__ == "__main__":
    key = jax.random.PRNGKey(0)
    # NCHW input; only its leading (B, C) dims matter to the forward pass.
    x = jax.random.normal(key, (2, 4, 16, 16), dtype=jnp.float32)

    out = variance_constrained_ae_bottleneck(x, seed=0)
    out = jax.block_until_ready(out)

    assert out.shape == (2, 4), out.shape
    assert out.dtype == jnp.float32, out.dtype
    assert bool(jnp.all(jnp.isfinite(out)))
    # Noise with sigma=0.05 should be small in magnitude.
    assert float(jnp.max(jnp.abs(out))) < 1.0

    print("KERNEL_OK")
</pallas_src>

<mosaic_0001>
module attributes {stable_mosaic.version = 11 : i64} {
  func.func @_vcae_noise_kernel(%arg0: memref<1x4xi32, #tpu.memory_space<vmem>>, %arg1: memref<1x4xi32, #tpu.memory_space<vmem>>, %arg2: memref<2x4xf32, #tpu.memory_space<vmem>>) attributes {dimension_semantics = [], scalar_prefetch = 0 : i64, scratch_operands = 0 : i64, tpu.core_type = #tpu.core_type<tc>} {
    %c0 = arith.constant 0 : index
    %c0_0 = arith.constant 0 : index
    %0 = vector.load %arg0[%c0, %c0_0] : memref<1x4xi32, #tpu.memory_space<vmem>>, vector<1x4xi32>
    %c9_i32 = arith.constant 9 : i32
    %1 = vector.broadcast %c9_i32 : i32 to vector<1x4xi32>
    %2 = arith.shrui %0, %1 : vector<1x4xi32>
    %c1065353216_i32 = arith.constant 1065353216 : i32
    %3 = vector.broadcast %c1065353216_i32 : i32 to vector<1x4xi32>
    %4 = arith.ori %2, %3 : vector<1x4xi32>
    %5 = tpu.bitcast %4 : vector<1x4xi32> -> vector<1x4xf32>
    %c0_1 = arith.constant 0 : index
    %c0_2 = arith.constant 0 : index
    %6 = vector.load %arg1[%c0_1, %c0_2] : memref<1x4xi32, #tpu.memory_space<vmem>>, vector<1x4xi32>
    %c9_i32_3 = arith.constant 9 : i32
    %7 = vector.broadcast %c9_i32_3 : i32 to vector<1x4xi32>
    %8 = arith.shrui %6, %7 : vector<1x4xi32>
    %c1065353216_i32_4 = arith.constant 1065353216 : i32
    %9 = vector.broadcast %c1065353216_i32_4 : i32 to vector<1x4xi32>
    %10 = arith.ori %8, %9 : vector<1x4xi32>
    %11 = tpu.bitcast %10 : vector<1x4xi32> -> vector<1x4xf32>
    %cst = arith.constant 2.000000e+00 : f32
    %12 = vector.broadcast %cst : f32 to vector<1x4xf32>
    %13 = arith.subf %12, %5 : vector<1x4xf32>
    %cst_5 = arith.constant 1.000000e+00 : f32
    %14 = vector.broadcast %cst_5 : f32 to vector<1x4xf32>
    %15 = arith.subf %11, %14 : vector<1x4xf32>
    %cst_6 = arith.constant 6.28318548 : f32
    %16 = vector.broadcast %cst_6 : f32 to vector<1x4xf32>
    %17 = arith.mulf %16, %15 : vector<1x4xf32>
    %18 = math.log %13 : vector<1x4xf32>
    %cst_7 = arith.constant -2.000000e+00 : f32
    %19 = vector.broadcast %cst_7 : f32 to vector<1x4xf32>
    %20 = arith.mulf %19, %18 : vector<1x4xf32>
    %21 = math.sqrt %20 : vector<1x4xf32>
    %22 = math.cos %17 : vector<1x4xf32>
    %23 = arith.mulf %21, %22 : vector<1x4xf32>
    %24 = math.sin %17 : vector<1x4xf32>
    %25 = arith.mulf %21, %24 : vector<1x4xf32>
    %26 = tpu.concatenate %23, %25 in 0 : vector<1x4xf32>, vector<1x4xf32> -> vector<2x4xf32>
    %cst_8 = arith.constant 5.000000e-02 : f32
    %27 = vector.broadcast %cst_8 : f32 to vector<2x4xf32>
    %28 = arith.mulf %26, %27 : vector<2x4xf32>
    %cst_9 = arith.constant 0.000000e+00 : f32
    %29 = vector.broadcast %cst_9 : f32 to vector<2x4xf32>
    %30 = arith.addf %28, %29 : vector<2x4xf32>
    %c0_10 = arith.constant 0 : index
    %c0_11 = arith.constant 0 : index
    %31 = vector.load %arg2[%c0_10, %c0_11] : memref<2x4xf32, #tpu.memory_space<vmem>>, vector<2x4xf32>
    tpu.vector_store %arg2[%c0_10, %c0_11], %30 {strides = array<i32>} : memref<2x4xf32, #tpu.memory_space<vmem>>, vector<2x4xf32>,
    return
  }
}

</mosaic_0001>

<llo_original>
// kernel: tpu_custom_call.1
$region0: #{tpu_custom_call.1}
  #allocation0 [shape = 'u32[]', space=smem, size = 0x4, offset = 0x4, fixed_abs, tag = 'smem constant byte address 0x4 - core index']
  #allocation1 [shape = 'u32[144,128]{1,0:T(1,128)}', space=vmem, size = 0x12000, scoped, tag = 'internal scratch']
  %s0 = inlined_call_operand.hbm [shape: u32[1,4], index: 0, kind: input, shape index: {}]
  %s1 = inlined_call_operand.vmem [shape: u32[1,4], index: 1, kind: input, shape index: {}]
  %s2 = inlined_call_operand.hbm [shape: f32[2,4], index: 2, kind: output, shape index: {}]
  %s3 = sld [smem:[#allocation0]]
  $region22: #{tpu_custom_call.1} parent=0
    _
  %s5 = ssub.s32 1, %s3
  %s6 = scalar_select 0, %s5, %s3
  $region1: #{tpu_custom_call.1} parent=0
    #allocation2 [shape = 'u8[512]{0}', space=vmem, size = 0x400, scoped, tag = 'input window, operand 0, single buffered']
    #allocation3 [shape = 's32[1]{0}', space=sflag, size = 0x4, scoped, tag = 'scoped memory for tpu_custom_call.1']
    #allocation4 [shape = 's32[1]{0}', space=sflag, size = 0x4, scoped, tag = 'scoped memory for tpu_custom_call.1']
    #allocation5 [shape = 'u8[1024]{0}', space=vmem, size = 0x400, scoped, tag = 'output window, operand 0, single buffered']
    %7 = vsyncpa [#allocation3], 0
    %8 = vsyncpa [#allocation4], 0
    // Predicated region
    $region2: #{tpu_custom_call.1} parent=1 // pred_check
      _
    $region3: #{tpu_custom_call.1} parent=1 // pred_check_branch
      %10 = sbr.rel (0) target = $region5
    $region4: #{tpu_custom_call.1} parent=1 // pred_region
      %s12 = ssub.s32 16, 16
      %13 = vsyncadd [#allocation3], %s12
      %s15 = sshll.u32 [#allocation2], 4
      %s16 = int_to_ptr.vmem [resolvable:$true] %s15
      %18 = dma.hbm_to_vmem [thread:$0]  %s0, 16, %s16, [#allocation3]
    $region5: #{tpu_custom_call.1} parent=1 // pred_fallthru
      _
    // Predicated region
    $region6: #{tpu_custom_call.1} parent=1 // pred_check
      _
    $region7: #{tpu_custom_call.1} parent=1 // pred_check_branch
      %20 = sbr.rel (0) target = $region9
    $region8: #{tpu_custom_call.1} parent=1 // pred_region
      _
    $region9: #{tpu_custom_call.1} parent=1 // pred_fallthru
      _
    // Predicated region
    $region10: #{tpu_custom_call.1} parent=1 // pred_check
      _
    $region11: #{tpu_custom_call.1} parent=1 // pred_check_branch
      %22 = sbr.rel (0) target = $region13
    $region12: #{tpu_custom_call.1} parent=1 // pred_region
      %23 = dma.done [#allocation3], 16
    $region13: #{tpu_custom_call.1} parent=1 // pred_fallthru
      _
    %v24 = vld [vmem:[#allocation2] sm:$0x1]
    %v25 = vshrl.u32 %v24, 9
    %v26 = vor.u32 %v25, 1065353216
    %v28 = vld [vmem:[%s1] sm:$0x1]
    %v29 = vshrl.u32 %v28, 9
    %v30 = vor.u32 %v29, 1065353216
    %v32 = vsub.f32 2.0, %v26
    %v33 = vsub.f32 %v30, 1.0
    %v34 = vmul.f32 %v33, 6.2831855
    %v35 = vlog2.pop %v32
    %v36 = vmul.f32 %v35, 0.6931472
    %v37 = vmul.f32 %v36, -2.0
    %v38 = vrsqrt.pop %v37
    %v39 = vmul.f32 %v37, %v38
    %vm40 = vcmp.eq.f32.partialorder %v37, inf
    %v41 = vsel %vm40, %v37, %v39
    %vm42 = vcmp.eq.f32.partialorder %v37, 0.0
    %v43 = vand.u32 %v37, 2147483648
    %v44 = vsel %vm42, %v43, %v41
    %v45 = vand.u32 2147483647, %v34
    %vm46 = vcmp.le.f32.partialorder %v45, 0.7853982
    %vm47 = vcmp.lt.s32.totalorder %v34, 0
    %v48 = vand.u32 %v34, 2139095040
    %v49 = vshrl.u32 %v48, 23
    %v50 = vsub.s32 %v49, 127
    %v51 = vand.u32 2147483647, %v34
    %v52 = vand.u32 %v51, 8388607
    %v53 = vor.u32 %v52, 8388608
    %v54 = vsub.s32 0, %v53
    %v55 = vadd.s32 %v50, 1
    %vm56 = vcmp.gt.s32.totalorder %v55, 0
    %v57 = vsel %vm56, %v55, 0
    %v58 = vshrl.u32 %v57, 5
    %v59 = vand.u32 %v57, 31
    %v60 = vsub.s32 32, %v59
    %v61 = vshrl.u32 683565275, %v60
    %v62 = vshll.u32 683565275, %v59
    %v63 = vshrl.u32 2475754826, %v60
    %v64 = vor.u32 %v62, %v63
    %v65 = vshll.u32 2475754826, %v59
    %v66 = vshrl.u32 2131351028, %v60
    %v67 = vor.u32 %v65, %v66
    %v68 = vshll.u32 2131351028, %v59
    %v69 = vshrl.u32 2102212464, %v60
    %v70 = vor.u32 %v68, %v69
    %v71 = vshll.u32 2102212464, %v59
    %v72 = vshrl.u32 920167782, %v60
    %v73 = vor.u32 %v71, %v72
    %v74 = vshll.u32 920167782, %v59
    %v75 = vshrl.u32 1326507024, %v60
    %v76 = vor.u32 %v74, %v75
    %vm77 = vcmp.lt.s32.totalorder %v58, 1
    %vm78 = vcmp.lt.s32.totalorder %v58, 2
    %vm79 = vcmp.lt.s32.totalorder %v58, 3
    %vm80 = vcmp.lt.s32.totalorder %v58, 4
    %v81 = vsel %vm77, %v61, %v64
    %v82 = vsel %vm80, %v70, 2102212464
    %v83 = vsel %vm79, %v67, %v82
    %v84 = vsel %vm78, %v81, %v83
    %v85 = vsel %vm77, %v64, %v67
    %v86 = vsel %vm80, %v73, 920167782
    %v87 = vsel %vm79, %v70, %v86
    %v88 = vsel %vm78, %v85, %v87
    %v89 = vsel %vm77, %v67, %v70
    %v90 = vsel %vm80, %v76, 1326507024
    %v91 = vsel %vm79, %v73, %v90
    %v92 = vsel %vm78, %v89, %v91
    %v93 = vshll.u32 %v53, 8
    %v94 = vmul.u32.u64.compose %v93, %v92
    %v95 = vextract.low.u32 %v94
    %v96 = vextract.high.u32 %v94
    %v97 = vmul.u32.u64.compose %v93, %v88
    %v98 = vextract.low.u32 %v97
    %v99 = vextract.high.u32 %v97
    %v100 = vmul.u32 %v93, %v84
    %v101 = vadd.s32 %v96, %v98
    %vm102 = vc.u32 %v96, %v98
    %v103 = vadd.s32 %v99, 1
    %v104 = vsel %vm102, %v103, %v99
    %v105 = vadd.s32 %v100, %v104
    %v106 = vadd.s32 %v105, 536870912
    %v107 = vshrl.u32 %v106, 30
    %v108 = vshll.u32 %v107, 30
    %v109 = vsub.s32 %v105, %v108
    %vm110 = vcmp.lt.s32.totalorder %v109, 0
    %v111 = vsub.s32 0, %v109
    %v112 = vsel %vm110, %v111, %v109
    %v113 = vclz %v112
    %v114 = vsub.s32 %v113, 2
    %vm115 = vcmp.gt.s32.totalorder 0, %v114
    %v116 = vsel %vm115, 0, %v114
    %v117 = vsub.s32 32, %v116
    %v118 = vshll.u32 %v109, %v116
    %v119 = vshrl.u32 %v101, %v117
    %v120 = vor.u32 %v118, %v119
    %v121 = vsub.s32 4294967266, %v116
    %v122 = vadd.s32 %v121, 127
    %v123 = vshll.u32 %v122, 23
    %v124 = vor.u32 4788187, %v123
    %v125 = vand.u32 2147483647, %v124
    %v127 = vcvt.s32.f32 %v120
    %v128 = vmul.f32 %v127, %v125
    %v129 = vxor.u32 %v128, 2147483648
    %v130 = vsel %vm47, %v129, %v128
    %v131 = vsub.s32 4, %v107
    %v132 = vsel %vm47, %v131, %v107
    %v133 = vsel %vm46, %v34, %v130
    %v134 = vsel %vm46, 0, %v132
    %v135 = vcosq.f32.pop %v133
    %v136 = vsinq.f32.pop %v133
    %vm137 = vweird.f32 %v34
    %v138 = vand.u32 %v134, 3
    %vm139 = vcmp.lt.s32.totalorder %v138, 2
    %vm140 = vcmp.eq.s32.totalorder %v138, 0
    %v141 = vxor.u32 %v136, 2147483648
    %v142 = vsel %vm140, %v135, %v141
    %vm143 = vcmp.eq.s32.totalorder %v138, 2
    %v144 = vxor.u32 %v135, 2147483648
    %v145 = vsel %vm143, %v144, %v136
    %v146 = vsel %vm139, %v142, %v145
    %v147 = vsel %vm137, nan, %v146
    %v148 = vmul.f32 %v44, %v147
    %v149 = vand.u32 2147483647, %v34
    %vm150 = vcmp.le.f32.partialorder %v149, 0.7853982
    %vm151 = vcmp.lt.s32.totalorder %v34, 0
    %v152 = vand.u32 %v34, 2139095040
    %v153 = vshrl.u32 %v152, 23
    %v154 = vsub.s32 %v153, 127
    %v155 = vand.u32 2147483647, %v34
    %v156 = vand.u32 %v155, 8388607
    %v157 = vor.u32 %v156, 8388608
    %v158 = vsub.s32 0, %v157
    %v159 = vadd.s32 %v154, 1
    %vm160 = vcmp.gt.s32.totalorder %v159, 0
    %v161 = vsel %vm160, %v159, 0
    %v162 = vshrl.u32 %v161, 5
    %v163 = vand.u32 %v161, 31
    %v164 = vsub.s32 32, %v163
    %v165 = vshrl.u32 683565275, %v164
    %v166 = vshll.u32 683565275, %v163
    %v167 = vshrl.u32 2475754826, %v164
    %v168 = vor.u32 %v166, %v167
    %v169 = vshll.u32 2475754826, %v163
    %v170 = vshrl.u32 2131351028, %v164
    %v171 = vor.u32 %v169, %v170
    %v172 = vshll.u32 2131351028, %v163
    %v173 = vshrl.u32 2102212464, %v164
    %v174 = vor.u32 %v172, %v173
    %v175 = vshll.u32 2102212464, %v163
    %v176 = vshrl.u32 920167782, %v164
    %v177 = vor.u32 %v175, %v176
    %v178 = vshll.u32 920167782, %v163
    %v179 = vshrl.u32 1326507024, %v164
    %v180 = vor.u32 %v178, %v179
    %vm181 = vcmp.lt.s32.totalorder %v162, 1
    %vm182 = vcmp.lt.s32.totalorder %v162, 2
    %vm183 = vcmp.lt.s32.totalorder %v162, 3
    %vm184 = vcmp.lt.s32.totalorder %v162, 4
    %v185 = vsel %vm181, %v165, %v168
    %v186 = vsel %vm184, %v174, 2102212464
    %v187 = vsel %vm183, %v171, %v186
    %v188 = vsel %vm182, %v185, %v187
    %v189 = vsel %vm181, %v168, %v171
    %v190 = vsel %vm184, %v177, 920167782
    %v191 = vsel %vm183, %v174, %v190
    %v192 = vsel %vm182, %v189, %v191
    %v193 = vsel %vm181, %v171, %v174
    %v194 = vsel %vm184, %v180, 1326507024
    %v195 = vsel %vm183, %v177, %v194
    %v196 = vsel %vm182, %v193, %v195
    %v197 = vshll.u32 %v157, 8
    %v198 = vmul.u32.u64.compose %v197, %v196
    %v199 = vextract.low.u32 %v198
    %v200 = vextract.high.u32 %v198
    %v201 = vmul.u32.u64.compose %v197, %v192
    %v202 = vextract.low.u32 %v201
    %v203 = vextract.high.u32 %v201
    %v204 = vmul.u32 %v197, %v188
    %v205 = vadd.s32 %v200, %v202
    %vm206 = vc.u32 %v200, %v202
    %v207 = vadd.s32 %v203, 1
    %v208 = vsel %vm206, %v207, %v203
    %v209 = vadd.s32 %v204, %v208
    %v210 = vadd.s32 %v209, 536870912
    %v211 = vshrl.u32 %v210, 30
    %v212 = vshll.u32 %v211, 30
    %v213 = vsub.s32 %v209, %v212
    %vm214 = vcmp.lt.s32.totalorder %v213, 0
    %v215 = vsub.s32 0, %v213
    %v216 = vsel %vm214, %v215, %v213
    %v217 = vclz %v216
    %v218 = vsub.s32 %v217, 2
    %vm219 = vcmp.gt.s32.totalorder 0, %v218
    %v220 = vsel %vm219, 0, %v218
    %v221 = vsub.s32 32, %v220
    %v222 = vshll.u32 %v213, %v220
    %v223 = vshrl.u32 %v205, %v221
    %v224 = vor.u32 %v222, %v223
    %v225 = vsub.s32 4294967266, %v220
    %v226 = vadd.s32 %v225, 127
    %v227 = vshll.u32 %v226, 23
    %v228 = vor.u32 4788187, %v227
    %v229 = vand.u32 2147483647, %v228
    %v231 = vcvt.s32.f32 %v224
    %v232 = vmul.f32 %v231, %v229
    %v233 = vxor.u32 %v232, 2147483648
    %v234 = vsel %vm151, %v233, %v232
    %v235 = vsub.s32 4, %v211
    %v236 = vsel %vm151, %v235, %v211
    %v237 = vsel %vm150, %v34, %v234
    %v238 = vsel %vm150, 0, %v236
    %v239 = vcosq.f32.pop %v237
    %v240 = vsinq.f32.pop %v237
    %vm241 = vweird.f32 %v34
    %v242 = vadd.s32 %v238, 3
    %v243 = vand.u32 %v242, 3
    %vm244 = vcmp.lt.s32.totalorder %v243, 2
    %vm245 = vcmp.eq.s32.totalorder %v243, 0
    %v246 = vxor.u32 %v240, 2147483648
    %v247 = vsel %vm245, %v239, %v246
    %vm248 = vcmp.eq.s32.totalorder %v243, 2
    %v249 = vxor.u32 %v239, 2147483648
    %v250 = vsel %vm248, %v249, %v240
    %v251 = vsel %vm244, %v247, %v250
    %v252 = vsel %vm241, nan, %v251
    %v253 = vmul.f32 %v44, %v252
    %v255 = vrot.slane %v253, 7
    %vm257 = vcmask 1040384
    %v258 = vsel %vm257, %v148, %v255
    %v259 = vmul.f32 %v258, 0.05
    %v260 = vadd.f32 %v259, 0.0
    %vm261 = vcmask 25600
    %262 = vst.msk [vmem:[#allocation5] sm:$0x3] %vm261, %v260
    // Predicated region
    $region14: #{tpu_custom_call.1} parent=1 // pred_check
      _
    $region15: #{tpu_custom_call.1} parent=1 // pred_check_branch
      %264 = sbr.rel (0) target = $region17
    $region16: #{tpu_custom_call.1} parent=1 // pred_region
      %s266 = ssub.s32 32, 32
      %267 = vsyncadd [#allocation4], %s266
      %s269 = sshll.u32 [#allocation5], 4
      %s270 = int_to_ptr.vmem [resolvable:$true] %s269
      %272 = dma.vmem_to_hbm [thread:$0]  %s270, 32, %s2, [#allocation4]
    $region17: #{tpu_custom_call.1} parent=1 // pred_fallthru
      _
    // Predicated region
    $region18: #{tpu_custom_call.1} parent=1 // pred_check
      _
    $region19: #{tpu_custom_call.1} parent=1 // pred_check_branch
      %274 = sbr.rel (0) target = $region21
    $region20: #{tpu_custom_call.1} parent=1 // pred_region
      %275 = dma.done [#allocation4], 32
    $region21: #{tpu_custom_call.1} parent=1 // pred_fallthru
      _
    %276 = vsyncpa [#allocation3], 1
    %277 = vsyncpa [#allocation4], 1

</llo_original>
